<compile_context>
chip_gen: v5e
topology: v5e:2x2
jax: 0.10.0
libtpu: 0.0.40
codegen_flags: <defaults>
</compile_context>

<pallas_src>
import jax
import jax.numpy as jnp
from jax.experimental import pallas as pl
from jax.experimental.pallas import tpu as pltpu


def _round_up(x, m):
    return (x + m - 1) // m * m


def mlp_kernel(x_ref, w1_ref, b1_ref, w2_ref, b2_ref, w3_ref, b3_ref, o_ref):
    # Layer 1: (TB, D) @ (D, 128) + (1, 128) -> ReLU   (MXU, f32 accumulation)
    h1 = jnp.dot(x_ref[...], w1_ref[...], preferred_element_type=jnp.float32)
    h1 = jnp.maximum(h1 + b1_ref[...], 0.0)
    # Layer 2: (TB, 128) @ (128, 64) + (1, 64) -> ReLU (MXU)
    h2 = jnp.dot(h1, w2_ref[...], preferred_element_type=jnp.float32)
    h2 = jnp.maximum(h2 + b2_ref[...], 0.0)
    # Layer 3: single output column -> VPU multiply + XLU row-reduce instead of
    # an N=1 MXU matmul; scalar bias read from SMEM.
    y = jnp.sum(h2 * w3_ref[...], axis=-1, keepdims=True) + b3_ref[0, 0]  # (TB, 1)
    o_ref[...] = y.astype(o_ref.dtype)


def mlp_forward(x, w1, b1, w2, b2, w3, b3, *, block_batch=2048, compute_dtype=None):
    B, D = x.shape
    H1 = w1.shape[1]   # 128
    H2 = w2.shape[1]   # 64

    # Optional low-precision path for the large operands only (keeps f32 accum).
    if compute_dtype is not None and compute_dtype != x.dtype:
        x = x.astype(compute_dtype)
        w1 = w1.astype(compute_dtype)
    in_itemsize = jnp.dtype(x.dtype).itemsize

    # ---------------- batch-tile selection ----------------
    TB = min(block_batch, _round_up(B, 8))

    # VMEM budget: double-buffered x/out tiles + (double-buffered) resident
    # weights, with headroom under v7x's 32 MiB scoped default.
    VMEM_BUDGET = 24 * 1024 * 1024
    weight_bytes = 2 * ((D * H1) * in_itemsize + (H1 + H1 * H2 + H2 + H2) * 4)
    bytes_per_row = 2 * (D * in_itemsize + 1 * 4)   # x row + out row, double-buffered
    max_tb = max(8, ((VMEM_BUDGET - weight_bytes) // max(bytes_per_row, 1)) // 8 * 8)
    TB = max(8, min(TB, max_tb))

    # Keep >=2 grid steps when the batch allows it (v7x megacore).
    if B > 16 and pl.cdiv(B, TB) < 2:
        TB = max(8, _round_up(pl.cdiv(B, 2), 8))

    grid = (pl.cdiv(B, TB),)

    w3_row = w3.reshape(1, H2)   # (1, 64), lane-major for the VPU path
    b3_s = b3.reshape(1, 1)      # scalar bias -> SMEM

    resident = lambda shape: pl.BlockSpec(shape, lambda i: (0, 0))

    param_bytes = (D * H1) * in_itemsize + (H1 + H1 * H2 + H2 + H2 + 1) * 4
    cost = pl.CostEstimate(
        flops=2 * B * (D * H1 + H1 * H2 + H2),
        transcendentals=0,
        bytes_accessed=B * D * in_itemsize + B * 4 + param_bytes,
    )

    out = pl.pallas_call(
        mlp_kernel,
        out_shape=jax.ShapeDtypeStruct((B, 1), jnp.float32),
        grid=grid,
        in_specs=[
            pl.BlockSpec((TB, D), lambda i: (i, 0)),             # x: streamed per tile
            resident((D, H1)),  resident((1, H1)),               # layer 1 (VMEM-resident)
            resident((H1, H2)), resident((1, H2)),               # layer 2 (VMEM-resident)
            resident((1, H2)),                                   # w3 row  (VMEM-resident)
            pl.BlockSpec(memory_space=pltpu.MemorySpace.SMEM),   # b3 scalar in SMEM
        ],
        out_specs=pl.BlockSpec((TB, 1), lambda i: (i, 0)),
        compiler_params=pltpu.CompilerParams(
            dimension_semantics=("parallel",),
            vmem_limit_bytes=32 * 1024 * 1024,
        ),
        cost_estimate=cost,
    )(x, w1, b1, w2, b2, w3_row, b3_s)

    return out


def init_params(key, input_dim):
    """Deterministic init mimicking nn.Linear's uniform(-1/sqrt(fan_in), 1/sqrt(fan_in))."""
    def linear(k, fan_in, fan_out):
        kw, kb = jax.random.split(k)
        bound = 1.0 / jnp.sqrt(fan_in)
        # stored as (in, out) so the kernel computes x @ W
        w = jax.random.uniform(kw, (fan_in, fan_out), jnp.float32, -bound, bound)
        b = jax.random.uniform(kb, (1, fan_out), jnp.float32, -bound, bound)
        return w, b

    k1, k2, k3 = jax.random.split(key, 3)
    w1, b1 = linear(k1, input_dim, 128)
    w2, b2 = linear(k2, 128, 64)
    w3, b3 = linear(k3, 64, 1)
    return w1, b1, w2, b2, w3, b3


if __name__ == "__main__":
    key = jax.random.PRNGKey(0)
    kx, kp = jax.random.split(key)

    batch, input_dim = 8, 32
    x = jax.random.normal(kx, (batch, input_dim), jnp.float32)
    w1, b1, w2, b2, w3, b3 = init_params(kp, input_dim)

    out = mlp_forward(x, w1, b1, w2, b2, w3, b3)
    out = jax.block_until_ready(out)

    # reference check in plain JAX
    h1 = jnp.maximum(x @ w1 + b1, 0.0)
    h2 = jnp.maximum(h1 @ w2 + b2, 0.0)
    ref = h2 @ w3 + b3
    assert out.shape == (batch, 1)
    assert jnp.allclose(out, ref, atol=1e-5, rtol=1e-5)

    print("KERNEL_OK")
</pallas_src>

<mosaic_0001>
module attributes {stable_mosaic.version = 11 : i64} {
  func.func @mlp_kernel(%arg0: i32, %arg1: memref<8x32xf32, #tpu.memory_space<vmem>>, %arg2: memref<32x128xf32, #tpu.memory_space<vmem>>, %arg3: memref<1x128xf32, #tpu.memory_space<vmem>>, %arg4: memref<128x64xf32, #tpu.memory_space<vmem>>, %arg5: memref<1x64xf32, #tpu.memory_space<vmem>>, %arg6: memref<1x64xf32, #tpu.memory_space<vmem>>, %arg7: memref<1x1xf32, #tpu.memory_space<smem>>, %arg8: memref<8x1xf32, #tpu.memory_space<vmem>>) attributes {dimension_semantics = [#tpu.dimension_semantics<parallel>], iteration_bounds = array<i64: 1>, scalar_prefetch = 0 : i64, scratch_operands = 0 : i64, tpu.core_type = #tpu.core_type<tc>, window_params = [{transform_indices = @transform_0, window_bounds = array<i64: 8, 32>}, {pipeline_mode = #tpu.pipeline_mode<synchronous>, transform_indices = @transform_1, window_bounds = array<i64: 32, 128>}, {pipeline_mode = #tpu.pipeline_mode<synchronous>, transform_indices = @transform_2, window_bounds = array<i64: 1, 128>}, {pipeline_mode = #tpu.pipeline_mode<synchronous>, transform_indices = @transform_3, window_bounds = array<i64: 128, 64>}, {pipeline_mode = #tpu.pipeline_mode<synchronous>, transform_indices = @transform_4, window_bounds = array<i64: 1, 64>}, {pipeline_mode = #tpu.pipeline_mode<synchronous>, transform_indices = @transform_5, window_bounds = array<i64: 1, 64>}, {transform_indices = @transform_6, window_bounds = array<i64: 1, 1>}, {transform_indices = @transform_7, window_bounds = array<i64: 8, 1>}]} {
    %c0 = arith.constant 0 : index
    %c0_0 = arith.constant 0 : index
    %0 = vector.load %arg1[%c0, %c0_0] : memref<8x32xf32, #tpu.memory_space<vmem>>, vector<8x32xf32>
    %c0_1 = arith.constant 0 : index
    %c0_2 = arith.constant 0 : index
    %1 = vector.load %arg2[%c0_1, %c0_2] : memref<32x128xf32, #tpu.memory_space<vmem>>, vector<32x128xf32>
    %cst = arith.constant dense<0.000000e+00> : vector<8x128xf32>
    %2 = tpu.matmul %0, %1, %cst {dimension_numbers = #tpu.dot_dimension_numbers<[1], [0], [0], [1], [0, 0, 1, 1], [], []>} : vector<8x32xf32>, vector<32x128xf32>, vector<8x128xf32> -> vector<8x128xf32>
    %c0_3 = arith.constant 0 : index
    %c0_4 = arith.constant 0 : index
    %3 = vector.load %arg3[%c0_3, %c0_4] : memref<1x128xf32, #tpu.memory_space<vmem>>, vector<1x128xf32>
    %4 = vector.broadcast %3 : vector<1x128xf32> to vector<8x128xf32>
    %5 = arith.addf %2, %4 : vector<8x128xf32>
    %cst_5 = arith.constant 0.000000e+00 : f32
    %6 = vector.broadcast %cst_5 : f32 to vector<8x128xf32>
    %7 = arith.maximumf %5, %6 : vector<8x128xf32>
    %c0_6 = arith.constant 0 : index
    %c0_7 = arith.constant 0 : index
    %8 = vector.load %arg4[%c0_6, %c0_7] : memref<128x64xf32, #tpu.memory_space<vmem>>, vector<128x64xf32>
    %cst_8 = arith.constant dense<0.000000e+00> : vector<8x64xf32>
    %9 = tpu.matmul %7, %8, %cst_8 {dimension_numbers = #tpu.dot_dimension_numbers<[1], [0], [0], [1], [0, 0, 1, 1], [], []>} : vector<8x128xf32>, vector<128x64xf32>, vector<8x64xf32> -> vector<8x64xf32>
    %c0_9 = arith.constant 0 : index
    %c0_10 = arith.constant 0 : index
    %10 = vector.load %arg5[%c0_9, %c0_10] : memref<1x64xf32, #tpu.memory_space<vmem>>, vector<1x64xf32>
    %11 = vector.broadcast %10 : vector<1x64xf32> to vector<8x64xf32>
    %12 = arith.addf %9, %11 : vector<8x64xf32>
    %cst_11 = arith.constant 0.000000e+00 : f32
    %13 = vector.broadcast %cst_11 : f32 to vector<8x64xf32>
    %14 = arith.maximumf %12, %13 : vector<8x64xf32>
    %c0_12 = arith.constant 0 : index
    %c0_13 = arith.constant 0 : index
    %15 = vector.load %arg6[%c0_12, %c0_13] : memref<1x64xf32, #tpu.memory_space<vmem>>, vector<1x64xf32>
    %16 = vector.broadcast %15 : vector<1x64xf32> to vector<8x64xf32>
    %17 = arith.mulf %14, %16 : vector<8x64xf32>
    %cst_14 = arith.constant dense<0.000000e+00> : vector<8xf32>
    %18 = vector.multi_reduction <add>, %17, %cst_14 [1] : vector<8x64xf32> to vector<8xf32>
    %19 = vector.shape_cast %18 : vector<8xf32> to vector<8x1xf32>
    %c0_15 = arith.constant 0 : index
    %c0_16 = arith.constant 0 : index
    %20 = memref.load %arg7[%c0_15, %c0_16] : memref<1x1xf32, #tpu.memory_space<smem>>
    %21 = vector.broadcast %20 : f32 to vector<8x1xf32>
    %22 = arith.addf %19, %21 : vector<8x1xf32>
    %c0_17 = arith.constant 0 : index
    %c0_18 = arith.constant 0 : index
    %23 = vector.load %arg8[%c0_17, %c0_18] : memref<8x1xf32, #tpu.memory_space<vmem>>, vector<8x1xf32>
    tpu.vector_store %arg8[%c0_17, %c0_18], %22 {strides = array<i32>} : memref<8x1xf32, #tpu.memory_space<vmem>>, vector<8x1xf32>,
    return
  }
  func.func @transform_0(%arg0: i32) -> (i32, i32) {
    %c0_i32 = arith.constant 0 : i32
    %c0_i32_0 = arith.constant 0 : i32
    return %arg0, %c0_i32 : i32, i32
  }
  func.func @transform_1(%arg0: i32) -> (i32, i32) {
    %c0_i32 = arith.constant 0 : i32
    %c0_i32_0 = arith.constant 0 : i32
    %c0_i32_1 = arith.constant 0 : i32
    return %c0_i32, %c0_i32_0 : i32, i32
  }
  func.func @transform_2(%arg0: i32) -> (i32, i32) {
    %c0_i32 = arith.constant 0 : i32
    %c0_i32_0 = arith.constant 0 : i32
    %c0_i32_1 = arith.constant 0 : i32
    return %c0_i32, %c0_i32_0 : i32, i32
  }
  func.func @transform_3(%arg0: i32) -> (i32, i32) {
    %c0_i32 = arith.constant 0 : i32
    %c0_i32_0 = arith.constant 0 : i32
    %c0_i32_1 = arith.constant 0 : i32
    return %c0_i32, %c0_i32_0 : i32, i32
  }
  func.func @transform_4(%arg0: i32) -> (i32, i32) {
    %c0_i32 = arith.constant 0 : i32
    %c0_i32_0 = arith.constant 0 : i32
    %c0_i32_1 = arith.constant 0 : i32
    return %c0_i32, %c0_i32_0 : i32, i32
  }
  func.func @transform_5(%arg0: i32) -> (i32, i32) {
    %c0_i32 = arith.constant 0 : i32
    %c0_i32_0 = arith.constant 0 : i32
    %c0_i32_1 = arith.constant 0 : i32
    return %c0_i32, %c0_i32_0 : i32, i32
  }
  func.func @transform_6(%arg0: i32) -> (i32, i32) {
    %c0_i32 = arith.constant 0 : i32
    %c0_i32_0 = arith.constant 0 : i32
    %c0_i32_1 = arith.constant 0 : i32
    return %c0_i32, %c0_i32_0 : i32, i32
  }
  func.func @transform_7(%arg0: i32) -> (i32, i32) {
    %c0_i32 = arith.constant 0 : i32
    %c0_i32_0 = arith.constant 0 : i32
    return %arg0, %c0_i32 : i32, i32
  }
}

</mosaic_0001>

<llo_original>
// kernel: tpu_custom_call.1
$region0: #{tpu_custom_call.1}
  #allocation0 [shape = 'u32[]', space=smem, size = 0x4, offset = 0x4, fixed_abs, tag = 'smem constant byte address 0x4 - core index']
  #allocation1 [shape = 'u32[72,128]{1,0:T(1,128)}', space=vmem, size = 0x9000, scoped, tag = 'internal scratch']
  #allocation2 [shape = 'f32[1,1]{1,0:T(1,128)S(6)}', space=smem, size = 0x200, scoped, tag = 'scoped memory for tpu_custom_call.1']
  %s0 = inlined_call_operand.vmem [shape: f32[8,32], index: 0, kind: input, shape index: {}]
  %s1 = inlined_call_operand.vmem [shape: f32[32,128], index: 1, kind: input, shape index: {}]
  %s2 = inlined_call_operand.vmem [shape: f32[1,128], index: 2, kind: input, shape index: {}]
  %s3 = inlined_call_operand.vmem [shape: f32[128,64], index: 3, kind: input, shape index: {}]
  %s4 = inlined_call_operand.vmem [shape: f32[1,64], index: 4, kind: input, shape index: {}]
  %s5 = inlined_call_operand.vmem [shape: f32[1,64], index: 5, kind: input, shape index: {}]
  %s6 = inlined_call_operand.<no memory space> [shape: f32[1,1], index: 6, kind: input, shape index: {}]
  %s7 = inlined_call_operand.vmem [shape: f32[8,1], index: 7, kind: output, shape index: {}]
  %s8 = sld [smem:[#allocation0]]
  $region38: #{tpu_custom_call.1} parent=0
    _
  %s10 = ssub.s32 1, %s8
  %s11 = scalar_select 0, %s10, %s8
  %12 = sst [smem:[#allocation2]] %s6
  // Predicated region
  $region2: #{tpu_custom_call.1} parent=0 // pred_check
    _
  $region3: #{tpu_custom_call.1} parent=0 // pred_check_branch
    %14 = sbr.rel (0) target = $region5
  $region4: #{tpu_custom_call.1} parent=0 // pred_region
    _
  $region5: #{tpu_custom_call.1} parent=0 // pred_fallthru
    _
  // Predicated region
  $region6: #{tpu_custom_call.1} parent=0 // pred_check
    _
  $region7: #{tpu_custom_call.1} parent=0 // pred_check_branch
    %16 = sbr.rel (0) target = $region9
  $region8: #{tpu_custom_call.1} parent=0 // pred_region
    _
  $region9: #{tpu_custom_call.1} parent=0 // pred_fallthru
    _
  // Predicated region
  $region10: #{tpu_custom_call.1} parent=0 // pred_check
    _
  $region11: #{tpu_custom_call.1} parent=0 // pred_check_branch
    %18 = sbr.rel (0) target = $region13
  $region12: #{tpu_custom_call.1} parent=0 // pred_region
    _
  $region13: #{tpu_custom_call.1} parent=0 // pred_fallthru
    _
  // Predicated region
  $region14: #{tpu_custom_call.1} parent=0 // pred_check
    _
  $region15: #{tpu_custom_call.1} parent=0 // pred_check_branch
    %20 = sbr.rel (0) target = $region17
  $region16: #{tpu_custom_call.1} parent=0 // pred_region
    _
  $region17: #{tpu_custom_call.1} parent=0 // pred_fallthru
    _
  // Predicated region
  $region18: #{tpu_custom_call.1} parent=0 // pred_check
    _
  $region19: #{tpu_custom_call.1} parent=0 // pred_check_branch
    %22 = sbr.rel (0) target = $region21
  $region20: #{tpu_custom_call.1} parent=0 // pred_region
    _
  $region21: #{tpu_custom_call.1} parent=0 // pred_fallthru
    _
  // Predicated region
  $region22: #{tpu_custom_call.1} parent=0 // pred_check
    _
  $region23: #{tpu_custom_call.1} parent=0 // pred_check_branch
    %24 = sbr.rel (0) target = $region25
  $region24: #{tpu_custom_call.1} parent=0 // pred_region
    _
  $region25: #{tpu_custom_call.1} parent=0 // pred_fallthru
    _
  // Predicated region
  $region26: #{tpu_custom_call.1} parent=0 // pred_check
    _
  $region27: #{tpu_custom_call.1} parent=0 // pred_check_branch
    %26 = sbr.rel (0) target = $region29
  $region28: #{tpu_custom_call.1} parent=0 // pred_region
    _
  $region29: #{tpu_custom_call.1} parent=0 // pred_fallthru
    _
  %v27 = vld [vmem:[%s0] sm:$0xff]
  %v28 = vld [vmem:[%s1] sm:$0xff]
  %v29 = vld [vmem:[%s1 + $0x8] sm:$0xff]
  %v30 = vld [vmem:[%s1 + $0x10] sm:$0xff]
  %v31 = vld [vmem:[%s1 + $0x18] sm:$0xff]
  %v32 = vld [vmem:[%s2] sm:$0x1]
  %v34 = vperm.slane %v32, 0
  %vm36 = vcmask 261120
  %v38 = vsel %vm36, %v27, 0
  %40 = vmatpush.msra.mxu0 0.0
  %41 = vmatpush.msra.mxu0 0.0
  %42 = vmatpush.msra.mxu0 0.0
  %43 = vmatpush.msra.mxu0 0.0
  %44 = vmatpush.msra.mxu0 0.0
  %45 = vmatpush.msra.mxu0 0.0
  %46 = vmatpush.msra.mxu0 0.0
  %47 = vmatpush.msra.mxu0 0.0
  %48 = vmatpush.msra.mxu0 0.0
  %49 = vmatpush.msra.mxu0 0.0
  %50 = vmatpush.msra.mxu0 0.0
  %51 = vmatpush.msra.mxu0 0.0
  %52 = vmatpush.msra.mxu0 %v31
  %53 = vmatpush.msra.mxu0 %v30
  %54 = vmatpush.msra.mxu0 %v29
  %55 = vmatpush.msra.mxu0 %v28
  %56 = vmatmul.f32.gmra.mxu0 %v38
  %v57 = vpop.f32.mrf.mxu0
  %v58 = vadd.f32 %v34, %v57
  %59 = vdwg.mxu0
  %v60 = vmax.f32 %v58, 0.0
  %v61 = vld [vmem:[%s3] sm:$0xff]
  %v62 = vld [vmem:[%s3 + $0x8] sm:$0xff]
  %v63 = vld [vmem:[%s3 + $0x10] sm:$0xff]
  %v64 = vld [vmem:[%s3 + $0x18] sm:$0xff]
  %v65 = vld [vmem:[%s3 + $0x20] sm:$0xff]
  %v66 = vld [vmem:[%s3 + $0x28] sm:$0xff]
  %v67 = vld [vmem:[%s3 + $0x30] sm:$0xff]
  %v68 = vld [vmem:[%s3 + $0x38] sm:$0xff]
  %v69 = vld [vmem:[%s3 + $0x40] sm:$0xff]
  %v70 = vld [vmem:[%s3 + $0x48] sm:$0xff]
  %v71 = vld [vmem:[%s3 + $0x50] sm:$0xff]
  %v72 = vld [vmem:[%s3 + $0x58] sm:$0xff]
  %v73 = vld [vmem:[%s3 + $0x60] sm:$0xff]
  %v74 = vld [vmem:[%s3 + $0x68] sm:$0xff]
  %v75 = vld [vmem:[%s3 + $0x70] sm:$0xff]
  %v76 = vld [vmem:[%s3 + $0x78] sm:$0xff]
  %v77 = vld [vmem:[%s4] sm:$0x1]
  %v79 = vperm.slane %v77, 0
  %81 = vmatpush.msra.mxu0 %v76
  %82 = vmatpush.msra.mxu0 %v75
  %83 = vmatpush.msra.mxu0 %v74
  %84 = vmatpush.msra.mxu0 %v73
  %85 = vmatpush.msra.mxu0 %v72
  %86 = vmatpush.msra.mxu0 %v71
  %87 = vmatpush.msra.mxu0 %v70
  %88 = vmatpush.msra.mxu0 %v69
  %89 = vmatpush.msra.mxu0 %v68
  %90 = vmatpush.msra.mxu0 %v67
  %91 = vmatpush.msra.mxu0 %v66
  %92 = vmatpush.msra.mxu0 %v65
  %93 = vmatpush.msra.mxu0 %v64
  %94 = vmatpush.msra.mxu0 %v63
  %95 = vmatpush.msra.mxu0 %v62
  %96 = vmatpush.msra.mxu0 %v61
  %97 = vmatmul.f32.gmra.mxu0 %v60
  %v98 = vpop.f32.mrf.mxu0
  %v99 = vadd.f32 %v79, %v98
  %100 = vdwg.mxu0
  %v101 = vmax.f32 %v99, 0.0
  %v102 = vld [vmem:[%s5] sm:$0x1]
  %v104 = vperm.slane %v102, 0
  %v106 = vmul.f32 %v101, %v104
  %vm107 = vcmask 523264
  %v108 = vsel %vm107, %v106, 0.0
  %109 = vadd.xlane.f32.xlu0 %v108
  %v110 = vpop.xlane.xlu0 %109
  %s111 = sld [smem:[#allocation2]]
  %v112 = vstv %s111
  %v113 = vadd.f32 %v110, %v112
  %vm114 = vcmask 7168
  %115 = vst.msk [vmem:[%s7] sm:$0xff] %vm114, %v113
  // Predicated region
  $region30: #{tpu_custom_call.1} parent=0 // pred_check
    _
  $region31: #{tpu_custom_call.1} parent=0 // pred_check_branch
    %117 = sbr.rel (0) target = $region33
  $region32: #{tpu_custom_call.1} parent=0 // pred_region
    _
  $region33: #{tpu_custom_call.1} parent=0 // pred_fallthru
    _
  // Predicated region
  $region34: #{tpu_custom_call.1} parent=0 // pred_check
    _
  $region35: #{tpu_custom_call.1} parent=0 // pred_check_branch
    %119 = sbr.rel (0) target = $region37
  $region36: #{tpu_custom_call.1} parent=0 // pred_region
    _
  $region37: #{tpu_custom_call.1} parent=0 // pred_fallthru
    _

</llo_original>
